<compile_context>
chip_gen: v7x
topology: tpu7x:2x2x1
jax: 0.10.0
libtpu: 0.0.40
codegen_flags: <defaults>
</compile_context>

<pallas_src>
import functools

import jax
import jax.numpy as jnp
from jax.experimental import pallas as pl
from jax.experimental.pallas import tpu as pltpu  # noqa: F401  (TPU backend)

LANE_PAD = 128  # lane-dense output width (full 128-lane vreg group)


# --------------------------------------------------------------------------
# Kernel: one MXU pass, bias already folded into the weight, lane-dense store.
# --------------------------------------------------------------------------
def custom_head_kernel(x_ref, w_ref, y_ref):
    # x: (B, F+1)  w: (F+1, 128)  ->  y: (B, 128)
    y = jnp.dot(x_ref[...], w_ref[...], preferred_element_type=jnp.float32)
    y_ref[...] = y.astype(y_ref.dtype)


# --------------------------------------------------------------------------
# One-time init: fuse both heads, fold biases in as the last row, lane-pad.
# (Equivalent of building the module's parameters once, not per forward.)
# --------------------------------------------------------------------------
def init_custom_head_params(w_climate, b_climate, w_day, b_day):
    out_c = w_climate.shape[1]
    out_d = w_day.shape[1]
    out_total = out_c + out_d
    assert out_total <= LANE_PAD

    w = jnp.concatenate([w_climate, w_day], axis=1)          # (F, out_total)
    b = jnp.concatenate([b_climate, b_day], axis=1)          # (1, out_total)
    wb = jnp.concatenate([w, b], axis=0)                      # (F+1, out_total)
    wb = jnp.pad(wb, ((0, 0), (0, LANE_PAD - out_total)))     # (F+1, 128)
    return wb, out_c, out_d


# --------------------------------------------------------------------------
# Forward: jitted so the ones-concat / output slices fuse with the kernel.
# --------------------------------------------------------------------------
@functools.partial(jax.jit, static_argnames=("out_c", "out_d"))
def custom_head(x, w_fused, out_c, out_d):
    B, F = x.shape
    Fp1 = F + 1
    assert w_fused.shape == (Fp1, LANE_PAD)

    # Bias folding: augment x with a ones column (the fused bias is row F of
    # w_fused), so the MXU does GEMM + bias in a single pass.
    x_aug = jnp.concatenate([x, jnp.ones((B, 1), x.dtype)], axis=1)

    # Advisory cost hint: this custom call is tiny (~65 KFLOPs, ~22 KB).
    cost = pl.CostEstimate(
        flops=2 * B * Fp1 * LANE_PAD,
        transcendentals=0,
        bytes_accessed=(B * Fp1 + Fp1 * LANE_PAD + B * LANE_PAD) * 4,
    )

    # Single grid point; every array is a full-extent block (exempt from the
    # (8,128) rule; the (B, 128) output is lane-aligned anyway).
    full = lambda shape: pl.BlockSpec(shape, lambda: tuple(0 for _ in shape))

    y = pl.pallas_call(
        custom_head_kernel,
        out_shape=jax.ShapeDtypeStruct((B, LANE_PAD), jnp.float32),
        grid=(),
        in_specs=[
            full((B, Fp1)),
            full((Fp1, LANE_PAD)),
        ],
        out_specs=full((B, LANE_PAD)),
        cost_estimate=cost,
    )(x_aug, w_fused)

    # Slice inside the same jit region; the lane-dense slab stays the kernel
    # output and XLA only materializes what the consumer actually uses.
    climate = y[:, :out_c]
    day = y[:, out_c:out_c + out_d]
    return climate, day


def reference(x, w_climate, b_climate, w_day, b_day):
    return (x @ w_climate + b_climate, x @ w_day + b_day)


if __name__ == "__main__":
    batch = 8
    num_ftrs = 32

    key = jax.random.PRNGKey(0)
    kx, kwc, kbc, kwd, kbd = jax.random.split(key, 5)

    # PyTorch nn.Linear default init: U(-1/sqrt(in), 1/sqrt(in))
    bound = 1.0 / jnp.sqrt(jnp.float32(num_ftrs))

    x = jax.random.normal(kx, (batch, num_ftrs), dtype=jnp.float32)
    w_climate = jax.random.uniform(kwc, (num_ftrs, 4), jnp.float32, -bound, bound)
    b_climate = jax.random.uniform(kbc, (1, 4), jnp.float32, -bound, bound)
    w_day = jax.random.uniform(kwd, (num_ftrs, 2), jnp.float32, -bound, bound)
    b_day = jax.random.uniform(kbd, (1, 2), jnp.float32, -bound, bound)

    # One-time parameter fusion (model init), not part of the per-call path.
    w_fused, out_c, out_d = init_custom_head_params(
        w_climate, b_climate, w_day, b_day)
    w_fused = jax.block_until_ready(w_fused)

    climate, day = custom_head(x, w_fused, out_c, out_d)
    climate = jax.block_until_ready(climate)
    day = jax.block_until_ready(day)

    ref_climate, ref_day = reference(x, w_climate, b_climate, w_day, b_day)
    assert climate.shape == (batch, 4)
    assert day.shape == (batch, 2)
    assert jnp.allclose(climate, ref_climate, atol=1e-5, rtol=1e-5)
    assert jnp.allclose(day, ref_day, atol=1e-5, rtol=1e-5)

    print("KERNEL_OK")
</pallas_src>

<mosaic_0001>
module attributes {stable_mosaic.version = 11 : i64} {
  func.func @custom_head_kernel(%arg0: memref<8x33xf32, #tpu.memory_space<vmem>>, %arg1: memref<33x128xf32, #tpu.memory_space<vmem>>, %arg2: memref<8x128xf32, #tpu.memory_space<vmem>>) attributes {dimension_semantics = [], scalar_prefetch = 0 : i64, scratch_operands = 0 : i64, tpu.core_type = #tpu.core_type<tc>} {
    %c0 = arith.constant 0 : index
    %c0_0 = arith.constant 0 : index
    %0 = vector.load %arg0[%c0, %c0_0] : memref<8x33xf32, #tpu.memory_space<vmem>>, vector<8x33xf32>
    %c0_1 = arith.constant 0 : index
    %c0_2 = arith.constant 0 : index
    %1 = vector.load %arg1[%c0_1, %c0_2] : memref<33x128xf32, #tpu.memory_space<vmem>>, vector<33x128xf32>
    %cst = arith.constant dense<0.000000e+00> : vector<8x128xf32>
    %2 = tpu.matmul %0, %1, %cst {dimension_numbers = #tpu.dot_dimension_numbers<[1], [0], [0], [1], [0, 0, 1, 1], [], []>} : vector<8x33xf32>, vector<33x128xf32>, vector<8x128xf32> -> vector<8x128xf32>
    %c0_3 = arith.constant 0 : index
    %c0_4 = arith.constant 0 : index
    %3 = vector.load %arg2[%c0_3, %c0_4] : memref<8x128xf32, #tpu.memory_space<vmem>>, vector<8x128xf32>
    tpu.vector_store %arg2[%c0_3, %c0_4], %2 {strides = array<i32>} : memref<8x128xf32, #tpu.memory_space<vmem>>, vector<8x128xf32>,
    return
  }
}

</mosaic_0001>

<llo_original>
// kernel: custom_head.1
$region0: #{custom_head.1}
  #allocation0 [shape = 'u32[]', space=smem, size = 0x4, offset = 0x4, fixed_abs, tag = 'smem constant byte address 0x4 - core index']
  #allocation1 [shape = 'u32[144,128]{1,0:T(1,128)}', space=vmem, size = 0x12000, scoped, tag = 'internal scratch']
  %s0 = inlined_call_operand.vmem [shape: f32[8,33], index: 0, kind: input, shape index: {}]
  %s1 = inlined_call_operand.hbm [shape: f32[33,128], index: 1, kind: input, shape index: {}]
  %s2 = inlined_call_operand.vmem [shape: f32[8,128], index: 2, kind: output, shape index: {}]
  %s3 = sld [smem:[#allocation0]]
  $region22: #{custom_head.1} parent=0
    _
  %s5 = ssub.s32 1, %s3
  %s6 = scalar_select 0, %s5, %s3
  $region1: #{custom_head.1} parent=0
    #allocation2 [shape = 'u8[20480]{0}', space=vmem, size = 0x5000, scoped, tag = 'input window, operand 1, single buffered']
    #allocation3 [shape = 's32[1]{0}', space=sflag, size = 0x4, scoped, tag = 'scoped memory for custom_head.1']
    %7 = vsyncpa [#allocation3], 0
    // Predicated region
    $region2: #{custom_head.1} parent=1 // pred_check
      _
    $region3: #{custom_head.1} parent=1 // pred_check_branch
      %9 = sbr.rel (0) target = $region5
    $region4: #{custom_head.1} parent=1 // pred_region
      _
    $region5: #{custom_head.1} parent=1 // pred_fallthru
      _
    // Predicated region
    $region6: #{custom_head.1} parent=1 // pred_check
      _
    $region7: #{custom_head.1} parent=1 // pred_check_branch
      %11 = sbr.rel (0) target = $region9
    $region8: #{custom_head.1} parent=1 // pred_region
      %s13 = ssub.s32 640, 640
      %14 = vsyncadd [#allocation3], %s13
      %s15 = sshll.u32 [#allocation2], 4
      %s16 = int_to_ptr.vmem [resolvable:$true] %s15
      %21 = dma.hbm_to_vmem [thread:$0]  %s1, 640, %s16, [#allocation3], 128, 128, 8
    $region9: #{custom_head.1} parent=1 // pred_fallthru
      _
    // Predicated region
    $region10: #{custom_head.1} parent=1 // pred_check
      _
    $region11: #{custom_head.1} parent=1 // pred_check_branch
      %23 = sbr.rel (0) target = $region13
    $region12: #{custom_head.1} parent=1 // pred_region
      %24 = dma.done [#allocation3], 640
    $region13: #{custom_head.1} parent=1 // pred_fallthru
      _
    %v25 = vld [vmem:[%s0] sm:$0xff]
    %v26 = vld [vmem:[#allocation2] sm:$0xff]
    %v27 = vld [vmem:[#allocation2 + $0x8] sm:$0xff]
    %v28 = vld [vmem:[#allocation2 + $0x10] sm:$0xff]
    %v29 = vld [vmem:[#allocation2 + $0x18] sm:$0xff]
    %v30 = vld [vmem:[#allocation2 + $0x20] sm:$0x1]
    %vm31 = vcmask 269312
    %v33 = vsel %vm31, %v25, 0
    %vm35 = vcmask 1040384
    %v37 = vsel %vm35, %v30, 0
    %39 = vmatprep.subr.mxu0 0.0
    %40 = vmatpush1.msra.mxu0 %v26
    %41 = vmatprep.subr.mxu0 0.0
    %42 = vmatpush1.msra.mxu0 %v27
    %43 = vmatprep.subr.mxu0 0.0
    %44 = vmatpush1.msra.mxu0 %v28
    %45 = vmatprep.subr.mxu0 0.0
    %46 = vmatpush1.msra.mxu0 %v29
    %47 = vmatprep.subr.mxu0 0.0
    %48 = vmatpush1.msra.mxu0 %v37
    %49 = vmatprep.subr.mxu0 0.0
    %50 = vmatpush1.msra.mxu0 0.0
    %51 = vmatprep.subr.mxu0 0.0
    %52 = vmatpush1.msra.mxu0 0.0
    %53 = vmatprep.subr.mxu0 0.0
    %54 = vmatpush1.msra.mxu0 0.0
    %55 = vmatprep.subr.mxu0 0.0
    %56 = vmatpush1.msra.mxu0 0.0
    %57 = vmatprep.subr.mxu0 0.0
    %58 = vmatpush1.msra.mxu0 0.0
    %59 = vmatprep.subr.mxu0 0.0
    %60 = vmatpush1.msra.mxu0 0.0
    %61 = vmatprep.subr.mxu0 0.0
    %62 = vmatpush1.msra.mxu0 0.0
    %63 = vmatprep.subr.mxu0 0.0
    %64 = vmatpush1.msra.mxu0 0.0
    %65 = vmatprep.subr.mxu0 0.0
    %66 = vmatpush1.msra.mxu0 0.0
    %67 = vmatprep.subr.mxu0 0.0
    %68 = vmatpush1.msra.mxu0 0.0
    %69 = vmatprep.subr.mxu0 0.0
    %70 = vmatpush1.msra.mxu0 0.0
    %71 = vmatprep.subr.mxu0 0.0
    %72 = vmatpush1.msra.mxu0 0.0
    %73 = vmatprep.subr.mxu0 0.0
    %74 = vmatpush1.msra.mxu0 0.0
    %75 = vmatprep.subr.mxu0 0.0
    %76 = vmatpush1.msra.mxu0 0.0
    %77 = vmatprep.subr.mxu0 0.0
    %78 = vmatpush1.msra.mxu0 0.0
    %79 = vmatprep.subr.mxu0 0.0
    %80 = vmatpush1.msra.mxu0 0.0
    %81 = vmatprep.subr.mxu0 0.0
    %82 = vmatpush1.msra.mxu0 0.0
    %83 = vmatprep.subr.mxu0 0.0
    %84 = vmatpush1.msra.mxu0 0.0
    %85 = vmatprep.subr.mxu0 0.0
    %86 = vmatpush1.msra.mxu0 0.0
    %87 = vmatprep.subr.mxu0 0.0
    %88 = vmatpush1.msra.mxu0 0.0
    %89 = vmatprep.subr.mxu0 0.0
    %90 = vmatpush1.msra.mxu0 0.0
    %91 = vmatprep.subr.mxu0 0.0
    %92 = vmatpush1.msra.mxu0 0.0
    %93 = vmatprep.subr.mxu0 0.0
    %94 = vmatpush1.msra.mxu0 0.0
    %95 = vmatprep.subr.mxu0 0.0
    %96 = vmatpush1.msra.mxu0 0.0
    %97 = vmatprep.subr.mxu0 0.0
    %98 = vmatpush1.msra.mxu0 0.0
    %99 = vmatprep.subr.mxu0 0.0
    %100 = vmatpush1.msra.mxu0 0.0
    %101 = vmatprep.subr.mxu0 0.0
    %102 = vmatpush1.msra.mxu0 0.0
    %103 = vmatprep.mubr.f32.mxu0 0.0
    %104 = vmatmul.mubr.f32.gmra.mrb[0].mxu0 %v33
    %v105 = vpop.f32.mrb[0].mxu0
    %v106 = vadd.f32 0.0, %v105
    %v107 = vpop.f32.mrb[0].mxu0
    %108 = vdwg.mxu0
    %109 = vst [vmem:[%s2] sm:$0xff] %v106
    // Predicated region
    $region14: #{custom_head.1} parent=1 // pred_check
      _
    $region15: #{custom_head.1} parent=1 // pred_check_branch
      %111 = sbr.rel (0) target = $region17
    $region16: #{custom_head.1} parent=1 // pred_region
      _
    $region17: #{custom_head.1} parent=1 // pred_fallthru
      _
    // Predicated region
    $region18: #{custom_head.1} parent=1 // pred_check
      _
    $region19: #{custom_head.1} parent=1 // pred_check_branch
      %113 = sbr.rel (0) target = $region21
    $region20: #{custom_head.1} parent=1 // pred_region
      _
    $region21: #{custom_head.1} parent=1 // pred_fallthru
      _
    %114 = vsyncpa [#allocation3], 1

</llo_original>
